<compile_context>
chip_gen: v7x
topology: tpu7x:2x2x1
jax: 0.10.0
libtpu: 0.0.40
codegen_flags: <defaults>
</compile_context>

<pallas_src>
import jax
import jax.numpy as jnp
from jax import lax
from jax.experimental import pallas as pl
from jax.experimental.pallas import tpu as pltpu

EPS = 1e-07
LANES = 128
CHUNK = 128  # rows per inner chunk: (128,128) f32 = 16 vregs per array


def _num_tensorcores() -> int:
    """2 on v7x (2 TC/chip), 1 on v5e/v6e; defaults to 1 if unknown."""
    try:
        kind = jax.devices()[0].device_kind.lower()
    except Exception:
        return 1
    return 2 if ("v7" in kind or "tpu7" in kind) else 1


def _make_kernel(tile_rows: int, chunk_rows: int, steps_per_core: int,
                 rows: int, needs_mask: bool):
    n_chunks = tile_rows // chunk_rows

    def kernel(p_ref, t_ref, m_ref, num_ref, den_ref):
        c = pl.program_id(0)  # core-split axis (parallel)
        i = pl.program_id(1)  # reduction axis (arbitrary)

        # Initialize this core's resident accumulator slabs on its first step.
        @pl.when(i == 0)
        def _():
            num_ref[...] = jnp.zeros_like(num_ref)
            den_ref[...] = jnp.zeros_like(den_ref)

        # Unclamped logical row offset of this block (fully-OOB blocks are
        # clamped to the last real block in the index_map but keep their
        # logical offset here, so they mask to zero).
        block_row0 = (c * steps_per_core + i) * tile_rows

        def tile_sum(masked: bool):
            # Chunked streaming reduction: bounded live vregs, f32 accumulate.
            def body(g, carry):
                num_acc, den_acc = carry
                r0 = pl.multiple_of(g * chunk_rows, chunk_rows)
                p = p_ref[pl.ds(r0, chunk_rows), :].astype(jnp.float32)
                t = t_ref[pl.ds(r0, chunk_rows), :].astype(jnp.float32)
                m = m_ref[pl.ds(r0, chunk_rows), :].astype(jnp.float32)
                num_c = m * jnp.abs(p - t)
                den_c = m
                if masked:
                    row_ids = (block_row0 + r0) + lax.broadcasted_iota(
                        jnp.int32, (chunk_rows, LANES), 0)
                    valid = row_ids < rows
                    # where (not multiply): OOB-padding garbage never propagates.
                    num_c = jnp.where(valid, num_c, 0.0)
                    den_c = jnp.where(valid, den_c, 0.0)
                # Fold chunk into (8,128): whole-vreg VPU adds, no cross-lane work.
                num_acc = num_acc + num_c.reshape(chunk_rows // 8, 8, LANES).sum(axis=0)
                den_acc = den_acc + den_c.reshape(chunk_rows // 8, 8, LANES).sum(axis=0)
                return num_acc, den_acc

            zeros = jnp.zeros((8, LANES), jnp.float32)
            num_acc, den_acc = lax.fori_loop(0, n_chunks, body, (zeros, zeros),
                                             unroll=True)
            num_ref[...] += num_acc
            den_ref[...] += den_acc

        if needs_mask:
            # Steady-state blocks: pure unmasked streaming path.
            @pl.when(block_row0 + tile_rows <= rows)
            def _():
                tile_sum(masked=False)

            # Last (partial) block and clamped fully-OOB blocks: masked path.
            @pl.when(block_row0 + tile_rows > rows)
            def _():
                tile_sum(masked=True)
        else:
            tile_sum(masked=False)

    return kernel


def masked_l1_loss(predicts, targets, masks, eps: float = EPS, tile_rows: int = 4096):
    assert predicts.shape == targets.shape == masks.shape

    n = 1
    for d in predicts.shape:
        n *= d

    # Keep mask HBM traffic narrow: bool -> uint8 (cast to f32 per chunk
    # inside the kernel).  Other dtypes stream in their native width.
    if masks.dtype == jnp.bool_:
        masks = masks.astype(jnp.uint8)

    p = predicts.reshape(-1)
    t = targets.reshape(-1)
    m = masks.reshape(-1)

    rows = n // LANES           # full 128-lane rows streamed by the kernel
    tail = n - rows * LANES     # <128 trailing elements handled in the wrapper

    if tail:
        pt = p[rows * LANES:].astype(jnp.float32)
        tt = t[rows * LANES:].astype(jnp.float32)
        mt = m[rows * LANES:].astype(jnp.float32)
        num_tail = jnp.sum(mt * jnp.abs(pt - tt))
        den_tail = jnp.sum(mt)
    else:
        num_tail = jnp.float32(0.0)
        den_tail = jnp.float32(0.0)

    if rows == 0:
        # Tiny input: nothing for the kernel to stream.
        return (num_tail / (den_tail + eps)).astype(jnp.float32)

    if tail:
        p_main, t_main, m_main = p[: rows * LANES], t[: rows * LANES], m[: rows * LANES]
    else:
        p_main, t_main, m_main = p, t, m
    p2 = p_main.reshape(rows, LANES)
    t2 = t_main.reshape(rows, LANES)
    m2 = m_main.reshape(rows, LANES)

    ncores = _num_tensorcores()

    # Effective tile: multiple of CHUNK rows (also satisfies int8 sublane
    # packing for uint8 masks), no bigger than one core's share.
    per_core_rows = -(-rows // ncores)
    per_core_rows_rc = -(-per_core_rows // CHUNK) * CHUNK
    tile = max(CHUNK, min((tile_rows // CHUNK) * CHUNK, per_core_rows_rc))

    steps_total = -(-rows // tile)
    steps_per_core = -(-steps_total // ncores)
    coverage = ncores * steps_per_core * tile
    needs_mask = coverage != rows
    last_block = steps_total - 1

    if needs_mask:
        # Clamp fully-OOB logical blocks onto the last real block; they are
        # masked out in-kernel via the unclamped logical row index.
        def in_idx(c, i):
            return (jnp.minimum(c * steps_per_core + i, last_block), 0)
    else:
        def in_idx(c, i):
            return (c * steps_per_core + i, 0)

    row_spec = pl.BlockSpec((tile, LANES), in_idx)
    # Per-core (8,128) accumulator slab: lane-dense, resident across the
    # inner reduction axis.
    out_spec = pl.BlockSpec((8, LANES), lambda c, i: (c, 0))

    kernel = _make_kernel(tile, CHUNK, steps_per_core, rows, needs_mask)

    num_out, den_out = pl.pallas_call(
        kernel,
        out_shape=(
            jax.ShapeDtypeStruct((ncores * 8, LANES), jnp.float32),
            jax.ShapeDtypeStruct((ncores * 8, LANES), jnp.float32),
        ),
        grid_spec=pltpu.PrefetchScalarGridSpec(
            num_scalar_prefetch=0,
            grid=(ncores, steps_per_core),
            in_specs=[row_spec, row_spec, row_spec],
            out_specs=(out_spec, out_spec),
        ),
        compiler_params=pltpu.CompilerParams(
            # TODO(synk): on v7x, swap to (pltpu.CORE_PARALLEL, pltpu.ARBITRARY)
            # if a profile shows plain "parallel" does not shard across the 2 TCs.
            dimension_semantics=("parallel", "arbitrary"),
            vmem_limit_bytes=32 * 1024 * 1024,
        ),
    )(p2, t2, m2)

    num = jnp.sum(num_out) + num_tail
    den = jnp.sum(den_out) + den_tail
    return (num / (den + eps)).astype(jnp.float32)


def _reference(predicts, targets, masks, eps=EPS):
    masks = masks.astype(jnp.float32)
    return jnp.sum(masks * jnp.abs(predicts - targets)) / (jnp.sum(masks) + eps)


if __name__ == "__main__":
    key = jax.random.PRNGKey(0)
    kp, kt, km, kp2, kt2, km2, kp3, kt3, km3 = jax.random.split(key, 9)

    # Primary NCHW shape consistent with a typical use of MaskedL1Loss.
    shape = (2, 4, 16, 16)
    predicts = jax.random.normal(kp, shape, dtype=jnp.float32)
    targets = jax.random.normal(kt, shape, dtype=jnp.float32)
    masks = (jax.random.uniform(km, shape) > 0.5).astype(jnp.float32)

    loss = jax.block_until_ready(masked_l1_loss(predicts, targets, masks))
    ref = _reference(predicts, targets, masks)
    assert jnp.allclose(loss, ref, rtol=1e-5, atol=1e-6), (loss, ref)

    # Ragged shape: exercises the <128-element lane tail (wrapper path) and
    # the gated in-kernel row mask / block clamping.
    shape2 = (2, 3, 17, 5)
    p2 = jax.random.normal(kp2, shape2, dtype=jnp.float32)
    t2 = jax.random.normal(kt2, shape2, dtype=jnp.float32)
    m2 = (jax.random.uniform(km2, shape2) > 0.5).astype(jnp.float32)

    loss2 = jax.block_until_ready(masked_l1_loss(p2, t2, m2))
    ref2 = _reference(p2, t2, m2)
    assert jnp.allclose(loss2, ref2, rtol=1e-5, atol=1e-6), (loss2, ref2)

    # Boolean mask: exercises the narrow uint8 mask streaming path.
    p3 = jax.random.normal(kp3, shape, dtype=jnp.float32)
    t3 = jax.random.normal(kt3, shape, dtype=jnp.float32)
    m3 = jax.random.uniform(km3, shape) > 0.5

    loss3 = jax.block_until_ready(masked_l1_loss(p3, t3, m3))
    ref3 = _reference(p3, t3, m3)
    assert jnp.allclose(loss3, ref3, rtol=1e-5, atol=1e-6), (loss3, ref3)

    print("KERNEL_OK")
</pallas_src>

<mosaic_0001>
module attributes {stable_mosaic.version = 11 : i64} {
  func.func @kernel(%arg0: i32, %arg1: i32, %arg2: memref<128x128xf32, #tpu.memory_space<vmem>>, %arg3: memref<128x128xf32, #tpu.memory_space<vmem>>, %arg4: memref<128x128xf32, #tpu.memory_space<vmem>>, %arg5: memref<8x128xf32, #tpu.memory_space<vmem>>, %arg6: memref<8x128xf32, #tpu.memory_space<vmem>>) attributes {dimension_semantics = [#tpu.dimension_semantics<parallel>, #tpu.dimension_semantics<arbitrary>], iteration_bounds = array<i64: 1, 1>, scalar_prefetch = 0 : i64, scratch_operands = 0 : i64, tpu.core_type = #tpu.core_type<tc>, window_params = [{transform_indices = @transform_0, window_bounds = array<i64: 128, 128>}, {transform_indices = @transform_1, window_bounds = array<i64: 128, 128>}, {transform_indices = @transform_2, window_bounds = array<i64: 128, 128>}, {transform_indices = @transform_3, window_bounds = array<i64: 8, 128>}, {transform_indices = @transform_4, window_bounds = array<i64: 8, 128>}]} {
    %c0_i32 = arith.constant 0 : i32
    %0 = arith.cmpi eq, %arg1, %c0_i32 : i32
    %1 = arith.extui %0 : i1 to i32
    %c0_i32_0 = arith.constant 0 : i32
    %2 = arith.cmpi ne, %1, %c0_i32_0 : i32
    scf.if %2 {
      %cst = arith.constant 0.000000e+00 : f32
      %14 = vector.broadcast %cst : f32 to vector<8x128xf32>
      %c0 = arith.constant 0 : index
      %c0_6 = arith.constant 0 : index
      %15 = vector.load %arg5[%c0, %c0_6] : memref<8x128xf32, #tpu.memory_space<vmem>>, vector<8x128xf32>
      tpu.vector_store %arg5[%c0, %c0_6], %14 {strides = array<i32>} : memref<8x128xf32, #tpu.memory_space<vmem>>, vector<8x128xf32>,
      %cst_7 = arith.constant 0.000000e+00 : f32
      %16 = vector.broadcast %cst_7 : f32 to vector<8x128xf32>
      %c0_8 = arith.constant 0 : index
      %c0_9 = arith.constant 0 : index
      %17 = vector.load %arg6[%c0_8, %c0_9] : memref<8x128xf32, #tpu.memory_space<vmem>>, vector<8x128xf32>
      tpu.vector_store %arg6[%c0_8, %c0_9], %16 {strides = array<i32>} : memref<8x128xf32, #tpu.memory_space<vmem>>, vector<8x128xf32>,
    } else {
    }
    %c1_i32 = arith.constant 1 : i32
    %3 = arith.muli %arg0, %c1_i32 : i32
    %4 = arith.addi %3, %arg1 : i32
    %c128_i32 = arith.constant 128 : i32
    %5 = arith.muli %4, %c128_i32 : i32
    %c128_i32_1 = arith.constant 128 : i32
    %6 = arith.addi %5, %c128_i32_1 : i32
    %c16_i32 = arith.constant 16 : i32
    %7 = arith.cmpi sle, %6, %c16_i32 : i32
    %8 = arith.extui %7 : i1 to i32
    %c0_i32_2 = arith.constant 0 : i32
    %9 = arith.cmpi ne, %8, %c0_i32_2 : i32
    scf.if %9 {
      %cst = arith.constant 0.000000e+00 : f32
      %14 = vector.broadcast %cst : f32 to vector<8x128xf32>
      %c0_i32_6 = arith.constant 0 : i32
      %c128_i32_7 = arith.constant 128 : i32
      %15 = arith.muli %c0_i32_6, %c128_i32_7 : i32
      %16 = tpu.assume_multiple %15, 128 : i32
      %17 = arith.index_cast %16 : i32 to index
      %c0 = arith.constant 0 : index
      %18 = vector.load %arg2[%17, %c0] : memref<128x128xf32, #tpu.memory_space<vmem>>, vector<128x128xf32>
      %19 = arith.index_cast %16 : i32 to index
      %c0_8 = arith.constant 0 : index
      %20 = vector.load %arg3[%19, %c0_8] : memref<128x128xf32, #tpu.memory_space<vmem>>, vector<128x128xf32>
      %21 = arith.index_cast %16 : i32 to index
      %c0_9 = arith.constant 0 : index
      %22 = vector.load %arg4[%21, %c0_9] : memref<128x128xf32, #tpu.memory_space<vmem>>, vector<128x128xf32>
      %23 = arith.subf %18, %20 : vector<128x128xf32>
      %24 = math.absf %23 : vector<128x128xf32>
      %25 = arith.mulf %22, %24 : vector<128x128xf32>
      %26 = vector.shape_cast %25 : vector<128x128xf32> to vector<16x8x128xf32>
      %cst_10 = arith.constant dense<0.000000e+00> : vector<8x128xf32>
      %27 = vector.multi_reduction <add>, %26, %cst_10 [0] : vector<16x8x128xf32> to vector<8x128xf32>
      %28 = arith.addf %14, %27 : vector<8x128xf32>
      %29 = vector.shape_cast %22 : vector<128x128xf32> to vector<16x8x128xf32>
      %cst_11 = arith.constant dense<0.000000e+00> : vector<8x128xf32>
      %30 = vector.multi_reduction <add>, %29, %cst_11 [0] : vector<16x8x128xf32> to vector<8x128xf32>
      %31 = arith.addf %14, %30 : vector<8x128xf32>
      %c1_i32_12 = arith.constant 1 : i32
      %c0_13 = arith.constant 0 : index
      %c0_14 = arith.constant 0 : index
      %32 = vector.load %arg5[%c0_13, %c0_14] : memref<8x128xf32, #tpu.memory_space<vmem>>, vector<8x128xf32>
      %33 = arith.addf %32, %28 : vector<8x128xf32>
      %c0_15 = arith.constant 0 : index
      %c0_16 = arith.constant 0 : index
      %34 = vector.load %arg5[%c0_15, %c0_16] : memref<8x128xf32, #tpu.memory_space<vmem>>, vector<8x128xf32>
      tpu.vector_store %arg5[%c0_15, %c0_16], %33 {strides = array<i32>} : memref<8x128xf32, #tpu.memory_space<vmem>>, vector<8x128xf32>,
      %c0_17 = arith.constant 0 : index
      %c0_18 = arith.constant 0 : index
      %35 = vector.load %arg6[%c0_17, %c0_18] : memref<8x128xf32, #tpu.memory_space<vmem>>, vector<8x128xf32>
      %36 = arith.addf %35, %31 : vector<8x128xf32>
      %c0_19 = arith.constant 0 : index
      %c0_20 = arith.constant 0 : index
      %37 = vector.load %arg6[%c0_19, %c0_20] : memref<8x128xf32, #tpu.memory_space<vmem>>, vector<8x128xf32>
      tpu.vector_store %arg6[%c0_19, %c0_20], %36 {strides = array<i32>} : memref<8x128xf32, #tpu.memory_space<vmem>>, vector<8x128xf32>,
    } else {
    }
    %c128_i32_3 = arith.constant 128 : i32
    %10 = arith.addi %5, %c128_i32_3 : i32
    %c16_i32_4 = arith.constant 16 : i32
    %11 = arith.cmpi sgt, %10, %c16_i32_4 : i32
    %12 = arith.extui %11 : i1 to i32
    %c0_i32_5 = arith.constant 0 : i32
    %13 = arith.cmpi ne, %12, %c0_i32_5 : i32
    scf.if %13 {
      %cst = arith.constant 0.000000e+00 : f32
      %14 = vector.broadcast %cst : f32 to vector<8x128xf32>
      %c0_i32_6 = arith.constant 0 : i32
      %c128_i32_7 = arith.constant 128 : i32
      %15 = arith.muli %c0_i32_6, %c128_i32_7 : i32
      %16 = tpu.assume_multiple %15, 128 : i32
      %17 = arith.index_cast %16 : i32 to index
      %c0 = arith.constant 0 : index
      %18 = vector.load %arg2[%17, %c0] : memref<128x128xf32, #tpu.memory_space<vmem>>, vector<128x128xf32>
      %19 = arith.index_cast %16 : i32 to index
      %c0_8 = arith.constant 0 : index
      %20 = vector.load %arg3[%19, %c0_8] : memref<128x128xf32, #tpu.memory_space<vmem>>, vector<128x128xf32>
      %21 = arith.index_cast %16 : i32 to index
      %c0_9 = arith.constant 0 : index
      %22 = vector.load %arg4[%21, %c0_9] : memref<128x128xf32, #tpu.memory_space<vmem>>, vector<128x128xf32>
      %23 = arith.subf %18, %20 : vector<128x128xf32>
      %24 = math.absf %23 : vector<128x128xf32>
      %25 = arith.mulf %22, %24 : vector<128x128xf32>
      %26 = arith.addi %5, %16 : i32
      %27 = tpu.iota {dimensions = array<i32: 0>} : vector<128x128xi32>
      %28 = vector.broadcast %26 : i32 to vector<128x128xi32>
      %29 = arith.addi %28, %27 : vector<128x128xi32>
      %c16_i32_10 = arith.constant 16 : i32
      %30 = vector.broadcast %c16_i32_10 : i32 to vector<128x128xi32>
      %31 = arith.cmpi slt, %29, %30 : vector<128x128xi32>
      %cst_11 = arith.constant 0.000000e+00 : f32
      %32 = vector.broadcast %cst_11 : f32 to vector<128x128xf32>
      %33 = arith.select %31, %25, %32 : vector<128x128xi1>, vector<128x128xf32>
      %cst_12 = arith.constant 0.000000e+00 : f32
      %34 = vector.broadcast %cst_12 : f32 to vector<128x128xf32>
      %35 = arith.select %31, %22, %34 : vector<128x128xi1>, vector<128x128xf32>
      %36 = vector.shape_cast %33 : vector<128x128xf32> to vector<16x8x128xf32>
      %cst_13 = arith.constant dense<0.000000e+00> : vector<8x128xf32>
      %37 = vector.multi_reduction <add>, %36, %cst_13 [0] : vector<16x8x128xf32> to vector<8x128xf32>
      %38 = arith.addf %14, %37 : vector<8x128xf32>
      %39 = vector.shape_cast %35 : vector<128x128xf32> to vector<16x8x128xf32>
      %cst_14 = arith.constant dense<0.000000e+00> : vector<8x128xf32>
      %40 = vector.multi_reduction <add>, %39, %cst_14 [0] : vector<16x8x128xf32> to vector<8x128xf32>
      %41 = arith.addf %14, %40 : vector<8x128xf32>
      %c1_i32_15 = arith.constant 1 : i32
      %c0_16 = arith.constant 0 : index
      %c0_17 = arith.constant 0 : index
      %42 = vector.load %arg5[%c0_16, %c0_17] : memref<8x128xf32, #tpu.memory_space<vmem>>, vector<8x128xf32>
      %43 = arith.addf %42, %38 : vector<8x128xf32>
      %c0_18 = arith.constant 0 : index
      %c0_19 = arith.constant 0 : index
      %44 = vector.load %arg5[%c0_18, %c0_19] : memref<8x128xf32, #tpu.memory_space<vmem>>, vector<8x128xf32>
      tpu.vector_store %arg5[%c0_18, %c0_19], %43 {strides = array<i32>} : memref<8x128xf32, #tpu.memory_space<vmem>>, vector<8x128xf32>,
      %c0_20 = arith.constant 0 : index
      %c0_21 = arith.constant 0 : index
      %45 = vector.load %arg6[%c0_20, %c0_21] : memref<8x128xf32, #tpu.memory_space<vmem>>, vector<8x128xf32>
      %46 = arith.addf %45, %41 : vector<8x128xf32>
      %c0_22 = arith.constant 0 : index
      %c0_23 = arith.constant 0 : index
      %47 = vector.load %arg6[%c0_22, %c0_23] : memref<8x128xf32, #tpu.memory_space<vmem>>, vector<8x128xf32>
      tpu.vector_store %arg6[%c0_22, %c0_23], %46 {strides = array<i32>} : memref<8x128xf32, #tpu.memory_space<vmem>>, vector<8x128xf32>,
    } else {
    }
    return
  }
  func.func @transform_0(%arg0: i32, %arg1: i32) -> (i32, i32) {
    %c1_i32 = arith.constant 1 : i32
    %0 = arith.muli %arg0, %c1_i32 : i32
    %1 = arith.addi %0, %arg1 : i32
    %c0_i32 = arith.constant 0 : i32
    %2 = arith.minsi %1, %c0_i32 : i32
    %c0_i32_0 = arith.constant 0 : i32
    %c0_i32_1 = arith.constant 0 : i32
    return %2, %c0_i32_0 : i32, i32
  }
  func.func @transform_1(%arg0: i32, %arg1: i32) -> (i32, i32) {
    %c1_i32 = arith.constant 1 : i32
    %0 = arith.muli %arg0, %c1_i32 : i32
    %1 = arith.addi %0, %arg1 : i32
    %c0_i32 = arith.constant 0 : i32
    %2 = arith.minsi %1, %c0_i32 : i32
    %c0_i32_0 = arith.constant 0 : i32
    %c0_i32_1 = arith.constant 0 : i32
    return %2, %c0_i32_0 : i32, i32
  }
  func.func @transform_2(%arg0: i32, %arg1: i32) -> (i32, i32) {
    %c1_i32 = arith.constant 1 : i32
    %0 = arith.muli %arg0, %c1_i32 : i32
    %1 = arith.addi %0, %arg1 : i32
    %c0_i32 = arith.constant 0 : i32
    %2 = arith.minsi %1, %c0_i32 : i32
    %c0_i32_0 = arith.constant 0 : i32
    %c0_i32_1 = arith.constant 0 : i32
    return %2, %c0_i32_0 : i32, i32
  }
  func.func @transform_3(%arg0: i32, %arg1: i32) -> (i32, i32) {
    %c0_i32 = arith.constant 0 : i32
    %c0_i32_0 = arith.constant 0 : i32
    return %arg0, %c0_i32 : i32, i32
  }
  func.func @transform_4(%arg0: i32, %arg1: i32) -> (i32, i32) {
    %c0_i32 = arith.constant 0 : i32
    %c0_i32_0 = arith.constant 0 : i32
    return %arg0, %c0_i32 : i32, i32
  }
}

</mosaic_0001>

<llo_original>
// kernel: tpu_custom_call.1
$region0: #{tpu_custom_call.1}
  #allocation0 [shape = 'u32[]', space=smem, size = 0x4, offset = 0x4, fixed_abs, tag = 'smem constant byte address 0x4 - core index']
  #allocation1 [shape = 'u32[144,128]{1,0:T(1,128)}', space=vmem, size = 0x12000, scoped, tag = 'internal scratch']
  %s0 = inlined_call_operand.hbm [shape: f32[16,128], index: 0, kind: input, shape index: {}]
  %s1 = inlined_call_operand.hbm [shape: f32[16,128], index: 1, kind: input, shape index: {}]
  %s2 = inlined_call_operand.hbm [shape: f32[16,128], index: 2, kind: input, shape index: {}]
  %s3 = inlined_call_operand.hbm [shape: f32[8,128], index: 3, kind: output, shape index: {0}]
  %s4 = inlined_call_operand.hbm [shape: f32[8,128], index: 4, kind: output, shape index: {1}]
  %5 = xla_tuple %s3, %s4
  %s6 = sld [smem:[#allocation0]]
  $region54: #{tpu_custom_call.1} parent=0
    _
  %s8 = ssub.s32 1, %s6
  %s9 = scalar_select 0, %s8, %s6
  $region1: #{tpu_custom_call.1} parent=0
    #allocation2 [shape = 'u8[65536]{0}', space=vmem, size = 0x10000, scoped, tag = 'input window, operand 0, single buffered']
    #allocation3 [shape = 's32[1]{0}', space=sflag, size = 0x4, scoped, tag = 'scoped memory for tpu_custom_call.1']
    #allocation4 [shape = 's32[1]{0}', space=sflag, size = 0x4, scoped, tag = 'scoped memory for tpu_custom_call.1']
    #allocation5 [shape = 'u8[65536]{0}', space=vmem, size = 0x10000, scoped, tag = 'input window, operand 1, single buffered']
    #allocation6 [shape = 's32[1]{0}', space=sflag, size = 0x4, scoped, tag = 'scoped memory for tpu_custom_call.1']
    #allocation7 [shape = 'u8[65536]{0}', space=vmem, size = 0x10000, scoped, tag = 'input window, operand 2, single buffered']
    #allocation8 [shape = 'u8[4096]{0}', space=vmem, size = 0x1000, scoped, tag = 'output window, operand 0, single buffered']
    #allocation9 [shape = 'u8[4096]{0}', space=vmem, size = 0x1000, scoped, tag = 'output window, operand 1, single buffered']
    #allocation10 [shape = 's32[1]{0}', space=sflag, size = 0x4, scoped, tag = 'scoped memory for tpu_custom_call.1']
    %10 = vsyncpa [#allocation3], 0
    %11 = vsyncpa [#allocation6], 0
    %12 = vsyncpa [#allocation4], 0
    %13 = vsyncpa [#allocation10], 0
    // Predicated region
    $region2: #{tpu_custom_call.1} parent=1 // pred_check
      _
    $region3: #{tpu_custom_call.1} parent=1 // pred_check_branch
      %15 = sbr.rel (0) target = $region5
    $region4: #{tpu_custom_call.1} parent=1 // pred_region
      %s16 = sadd.s32 0, 0
      %p17 = scmp.lt.s32.totalorder %s16, 0
      %s18 = scalar_select %p17, %s16, 0
      %s19 = smul.u32 16, %s18
      %s20 = ssub.s32 2, %s19
      %s21 = smul.u32 128, %s20
      %s23 = ssub.s32 2048, %s21
      %24 = vsyncadd [#allocation3], %s23
      %p25 = scmp.ne.s32.totalorder 0, %s21
      %s26 = smul.addr %s19, 128
      %s27 = scalar_lea.hbm %s0, %s26
      %s28 = smul.u32 8, %s20
      %s29 = sshll.u32 [#allocation2], 4
      %s30 = int_to_ptr.vmem [resolvable:$true] %s29
      %s31 = sshll.u32 %s28, 4
      %35 = dma.hbm_to_vmem [thread:$0]  (%p25), %s27, %s31, %s30, [#allocation3], 128, 128, 8
    $region5: #{tpu_custom_call.1} parent=1 // pred_fallthru
      _
    // Predicated region
    $region6: #{tpu_custom_call.1} parent=1 // pred_check
      _
    $region7: #{tpu_custom_call.1} parent=1 // pred_check_branch
      %37 = sbr.rel (0) target = $region9
    $region8: #{tpu_custom_call.1} parent=1 // pred_region
      %s38 = sadd.s32 0, 0
      %p39 = scmp.lt.s32.totalorder %s38, 0
      %s40 = scalar_select %p39, %s38, 0
      %s41 = smul.u32 16, %s40
      %s42 = ssub.s32 2, %s41
      %s43 = smul.u32 128, %s42
      %s45 = ssub.s32 2048, %s43
      %46 = vsyncadd [#allocation6], %s45
      %p47 = scmp.ne.s32.totalorder 0, %s43
      %s48 = smul.addr %s41, 128
      %s49 = scalar_lea.hbm %s1, %s48
      %s50 = smul.u32 8, %s42
      %s51 = sshll.u32 [#allocation5], 4
      %s52 = int_to_ptr.vmem [resolvable:$true] %s51
      %s53 = sshll.u32 %s50, 4
      %57 = dma.hbm_to_vmem [thread:$0]  (%p47), %s49, %s53, %s52, [#allocation6], 128, 128, 8
    $region9: #{tpu_custom_call.1} parent=1 // pred_fallthru
      _
    // Predicated region
    $region10: #{tpu_custom_call.1} parent=1 // pred_check
      _
    $region11: #{tpu_custom_call.1} parent=1 // pred_check_branch
      %59 = sbr.rel (0) target = $region13
    $region12: #{tpu_custom_call.1} parent=1 // pred_region
      %s60 = sadd.s32 0, 0
      %p61 = scmp.lt.s32.totalorder %s60, 0
      %s62 = scalar_select %p61, %s60, 0
      %s63 = smul.u32 16, %s62
      %s64 = ssub.s32 2, %s63
      %s65 = smul.u32 128, %s64
      %s67 = ssub.s32 2048, %s65
      %68 = vsyncadd [#allocation6], %s67
      %p69 = scmp.ne.s32.totalorder 0, %s65
      %s70 = smul.addr %s63, 128
      %s71 = scalar_lea.hbm %s2, %s70
      %s72 = smul.u32 8, %s64
      %s73 = sshll.u32 [#allocation7], 4
      %s74 = int_to_ptr.vmem [resolvable:$true] %s73
      %s75 = sshll.u32 %s72, 4
      %79 = dma.hbm_to_vmem [thread:$0]  (%p69), %s71, %s75, %s74, [#allocation6], 128, 128, 8
    $region13: #{tpu_custom_call.1} parent=1 // pred_fallthru
      _
    // Predicated region
    $region14: #{tpu_custom_call.1} parent=1 // pred_check
      _
    $region15: #{tpu_custom_call.1} parent=1 // pred_check_branch
      %81 = sbr.rel (0) target = $region17
    $region16: #{tpu_custom_call.1} parent=1 // pred_region
      %82 = dma.done [#allocation3], 2048
    $region17: #{tpu_custom_call.1} parent=1 // pred_fallthru
      _
    // Predicated region
    $region18: #{tpu_custom_call.1} parent=1 // pred_check
      _
    $region19: #{tpu_custom_call.1} parent=1 // pred_check_branch
      %84 = sbr.rel (0) target = $region21
    $region20: #{tpu_custom_call.1} parent=1 // pred_region
      %85 = dma.done [#allocation6], 2048
    $region21: #{tpu_custom_call.1} parent=1 // pred_fallthru
      _
    // Predicated region
    $region22: #{tpu_custom_call.1} parent=1 // pred_check
      _
    $region23: #{tpu_custom_call.1} parent=1 // pred_check_branch
      %87 = sbr.rel (0) target = $region25
    $region24: #{tpu_custom_call.1} parent=1 // pred_region
      %88 = dma.done [#allocation6], 2048
    $region25: #{tpu_custom_call.1} parent=1 // pred_fallthru
      _
    %s89 = sadd.s32 0, 0
    %p90 = scmp.lt.s32.totalorder %s89, 0
    %s91 = scalar_select %p90, %s89, 0
    %s92 = smul.u32 16, %s91
    %s93 = ssub.s32 2, %s92
    %s94 = smul.u32 128, %s93
    %s95 = sadd.s32 0, 0
    %p96 = scmp.lt.s32.totalorder %s95, 0
    %s97 = scalar_select %p96, %s95, 0
    %s98 = smul.u32 16, %s97
    %s99 = ssub.s32 2, %s98
    %s100 = smul.u32 128, %s99
    %s101 = sadd.s32 0, 0
    %p102 = scmp.lt.s32.totalorder %s101, 0
    %s103 = scalar_select %p102, %s101, 0
    %s104 = smul.u32 16, %s103
    %s105 = ssub.s32 2, %s104
    %s106 = smul.u32 128, %s105
    %p107 = scmp.eq.s32.totalorder 0, 0
    // Predicated region
    $region26: #{tpu_custom_call.1} parent=1 // pred_check
      %p108 = pneg %p107
    $region27: #{tpu_custom_call.1} parent=1 // pred_check_branch
      %110 = sbr.rel (%p108) target = $region29
    $region28: #{tpu_custom_call.1} parent=1 // pred_region
      %111 = vst [vmem:[#allocation8] sm:$0xff] 0.0
      %112 = vst [vmem:[#allocation9] sm:$0xff] 0.0
    $region29: #{tpu_custom_call.1} parent=1 // pred_fallthru
      _
    %s113 = sadd.s32 0, 0
    %s114 = smul.u32 %s113, 128
    %s115 = sadd.s32 %s114, 128
    %p116 = scmp.le.s32.totalorder %s115, 16
    // Predicated region
    $region30: #{tpu_custom_call.1} parent=1 // pred_check
      %p117 = pneg %p116
    $region31: #{tpu_custom_call.1} parent=1 // pred_check_branch
      %119 = sbr.rel (%p117) target = $region33
    $region32: #{tpu_custom_call.1} parent=1 // pred_region
      %v120 = vld [vmem:[#allocation2] sm:$0xff]
      %v121 = vld [vmem:[#allocation2 + $0x8] sm:$0xff]
      %v122 = vld [vmem:[#allocation2 + $0x10] sm:$0xff]
      %v123 = vld [vmem:[#allocation2 + $0x18] sm:$0xff]
      %v124 = vld [vmem:[#allocation2 + $0x20] sm:$0xff]
      %v125 = vld [vmem:[#allocation2 + $0x28] sm:$0xff]
      %v126 = vld [vmem:[#allocation2 + $0x30] sm:$0xff]
      %v127 = vld [vmem:[#allocation2 + $0x38] sm:$0xff]
      %v128 = vld [vmem:[#allocation2 + $0x40] sm:$0xff]
      %v129 = vld [vmem:[#allocation2 + $0x48] sm:$0xff]
      %v130 = vld [vmem:[#allocation2 + $0x50] sm:$0xff]
      %v131 = vld [vmem:[#allocation2 + $0x58] sm:$0xff]
      %v132 = vld [vmem:[#allocation2 + $0x60] sm:$0xff]
      %v133 = vld [vmem:[#allocation2 + $0x68] sm:$0xff]
      %v134 = vld [vmem:[#allocation2 + $0x70] sm:$0xff]
      %v135 = vld [vmem:[#allocation2 + $0x78] sm:$0xff]
      %v136 = vld [vmem:[#allocation5] sm:$0xff]
      %v137 = vld [vmem:[#allocation5 + $0x8] sm:$0xff]
      %v138 = vld [vmem:[#allocation5 + $0x10] sm:$0xff]
      %v139 = vld [vmem:[#allocation5 + $0x18] sm:$0xff]
      %v140 = vld [vmem:[#allocation5 + $0x20] sm:$0xff]
      %v141 = vld [vmem:[#allocation5 + $0x28] sm:$0xff]
      %v142 = vld [vmem:[#allocation5 + $0x30] sm:$0xff]
      %v143 = vld [vmem:[#allocation5 + $0x38] sm:$0xff]
      %v144 = vld [vmem:[#allocation5 + $0x40] sm:$0xff]
      %v145 = vld [vmem:[#allocation5 + $0x48] sm:$0xff]
      %v146 = vld [vmem:[#allocation5 + $0x50] sm:$0xff]
      %v147 = vld [vmem:[#allocation5 + $0x58] sm:$0xff]
      %v148 = vld [vmem:[#allocation5 + $0x60] sm:$0xff]
      %v149 = vld [vmem:[#allocation5 + $0x68] sm:$0xff]
      %v150 = vld [vmem:[#allocation5 + $0x70] sm:$0xff]
      %v151 = vld [vmem:[#allocation5 + $0x78] sm:$0xff]
      %v152 = vld [vmem:[#allocation7] sm:$0xff]
      %v153 = vld [vmem:[#allocation7 + $0x8] sm:$0xff]
      %v154 = vld [vmem:[#allocation7 + $0x10] sm:$0xff]
      %v155 = vld [vmem:[#allocation7 + $0x18] sm:$0xff]
      %v156 = vld [vmem:[#allocation7 + $0x20] sm:$0xff]
      %v157 = vld [vmem:[#allocation7 + $0x28] sm:$0xff]
      %v158 = vld [vmem:[#allocation7 + $0x30] sm:$0xff]
      %v159 = vld [vmem:[#allocation7 + $0x38] sm:$0xff]
      %v160 = vld [vmem:[#allocation7 + $0x40] sm:$0xff]
      %v161 = vld [vmem:[#allocation7 + $0x48] sm:$0xff]
      %v162 = vld [vmem:[#allocation7 + $0x50] sm:$0xff]
      %v163 = vld [vmem:[#allocation7 + $0x58] sm:$0xff]
      %v164 = vld [vmem:[#allocation7 + $0x60] sm:$0xff]
      %v165 = vld [vmem:[#allocation7 + $0x68] sm:$0xff]
      %v166 = vld [vmem:[#allocation7 + $0x70] sm:$0xff]
      %v167 = vld [vmem:[#allocation7 + $0x78] sm:$0xff]
      %v168 = vsub.f32 %v120, %v136
      %v169 = vsub.f32 %v121, %v137
      %v170 = vsub.f32 %v122, %v138
      %v171 = vsub.f32 %v123, %v139
      %v172 = vsub.f32 %v124, %v140
      %v173 = vsub.f32 %v125, %v141
      %v174 = vsub.f32 %v126, %v142
      %v175 = vsub.f32 %v127, %v143
      %v176 = vsub.f32 %v128, %v144
      %v177 = vsub.f32 %v129, %v145
      %v178 = vsub.f32 %v130, %v146
      %v179 = vsub.f32 %v131, %v147
      %v180 = vsub.f32 %v132, %v148
      %v181 = vsub.f32 %v133, %v149
      %v182 = vsub.f32 %v134, %v150
      %v183 = vsub.f32 %v135, %v151
      %v184 = vand.u32 2147483647, %v168
      %v185 = vand.u32 2147483647, %v169
      %v186 = vand.u32 2147483647, %v170
      %v187 = vand.u32 2147483647, %v171
      %v188 = vand.u32 2147483647, %v172
      %v189 = vand.u32 2147483647, %v173
      %v190 = vand.u32 2147483647, %v174
      %v191 = vand.u32 2147483647, %v175
      %v192 = vand.u32 2147483647, %v176
      %v193 = vand.u32 2147483647, %v177
      %v194 = vand.u32 2147483647, %v178
      %v195 = vand.u32 2147483647, %v179
      %v196 = vand.u32 2147483647, %v180
      %v197 = vand.u32 2147483647, %v181
      %v198 = vand.u32 2147483647, %v182
      %v199 = vand.u32 2147483647, %v183
      %v200 = vmul.f32 %v152, %v184
      %v201 = vmul.f32 %v153, %v185
      %v202 = vmul.f32 %v154, %v186
      %v203 = vmul.f32 %v155, %v187
      %v204 = vmul.f32 %v156, %v188
      %v205 = vmul.f32 %v157, %v189
      %v206 = vmul.f32 %v158, %v190
      %v207 = vmul.f32 %v159, %v191
      %v208 = vmul.f32 %v160, %v192
      %v209 = vmul.f32 %v161, %v193
      %v210 = vmul.f32 %v162, %v194
      %v211 = vmul.f32 %v163, %v195
      %v212 = vmul.f32 %v164, %v196
      %v213 = vmul.f32 %v165, %v197
      %v214 = vmul.f32 %v166, %v198
      %v215 = vmul.f32 %v167, %v199
      %v216 = vadd.f32 %v200, %v201
      %v217 = vadd.f32 %v216, %v202
      %v218 = vadd.f32 %v217, %v203
      %v219 = vadd.f32 %v218, %v204
      %v220 = vadd.f32 %v219, %v205
      %v221 = vadd.f32 %v220, %v206
      %v222 = vadd.f32 %v221, %v207
      %v223 = vadd.f32 %v222, %v208
      %v224 = vadd.f32 %v223, %v209
      %v225 = vadd.f32 %v224, %v210
      %v226 = vadd.f32 %v225, %v211
      %v227 = vadd.f32 %v226, %v212
      %v228 = vadd.f32 %v227, %v213
      %v229 = vadd.f32 %v228, %v214
      %v230 = vadd.f32 %v229, %v215
      %v231 = vadd.f32 %v230, 0.0
      %v232 = vadd.f32 %v152, %v153
      %v233 = vadd.f32 %v232, %v154
      %v234 = vadd.f32 %v233, %v155
      %v235 = vadd.f32 %v234, %v156
      %v236 = vadd.f32 %v235, %v157
      %v237 = vadd.f32 %v236, %v158
      %v238 = vadd.f32 %v237, %v159
      %v239 = vadd.f32 %v238, %v160
      %v240 = vadd.f32 %v239, %v161
      %v241 = vadd.f32 %v240, %v162
      %v242 = vadd.f32 %v241, %v163
      %v243 = vadd.f32 %v242, %v164
      %v244 = vadd.f32 %v243, %v165
      %v245 = vadd.f32 %v244, %v166
      %v246 = vadd.f32 %v245, %v167
      %v247 = vadd.f32 %v246, 0.0
      %v248 = vld [vmem:[#allocation8] sm:$0xff]
      %v249 = vadd.f32 %v248, %v231
      %250 = vst [vmem:[#allocation8] sm:$0xff] %v249
      %v251 = vld [vmem:[#allocation9] sm:$0xff]
      %v252 = vadd.f32 %v251, %v247
      %253 = vst [vmem:[#allocation9] sm:$0xff] %v252
    $region33: #{tpu_custom_call.1} parent=1 // pred_fallthru
      _
    %p254 = scmp.gt.s32.totalorder %s115, 16
    // Predicated region
    $region34: #{tpu_custom_call.1} parent=1 // pred_check
      %p255 = pneg %p254
    $region35: #{tpu_custom_call.1} parent=1 // pred_check_branch
      %257 = sbr.rel (%p255) target = $region37
    $region36: #{tpu_custom_call.1} parent=1 // pred_region
      %v258 = vld [vmem:[#allocation2] sm:$0xff]
      %v259 = vld [vmem:[#allocation2 + $0x8] sm:$0xff]
      %v260 = vld [vmem:[#allocation2 + $0x10] sm:$0xff]
      %v261 = vld [vmem:[#allocation2 + $0x18] sm:$0xff]
      %v262 = vld [vmem:[#allocation2 + $0x20] sm:$0xff]
      %v263 = vld [vmem:[#allocation2 + $0x28] sm:$0xff]
      %v264 = vld [vmem:[#allocation2 + $0x30] sm:$0xff]
      %v265 = vld [vmem:[#allocation2 + $0x38] sm:$0xff]
      %v266 = vld [vmem:[#allocation2 + $0x40] sm:$0xff]
      %v267 = vld [vmem:[#allocation2 + $0x48] sm:$0xff]
      %v268 = vld [vmem:[#allocation2 + $0x50] sm:$0xff]
      %v269 = vld [vmem:[#allocation2 + $0x58] sm:$0xff]
      %v270 = vld [vmem:[#allocation2 + $0x60] sm:$0xff]
      %v271 = vld [vmem:[#allocation2 + $0x68] sm:$0xff]
      %v272 = vld [vmem:[#allocation2 + $0x70] sm:$0xff]
      %v273 = vld [vmem:[#allocation2 + $0x78] sm:$0xff]
      %v274 = vld [vmem:[#allocation5] sm:$0xff]
      %v275 = vld [vmem:[#allocation5 + $0x8] sm:$0xff]
      %v276 = vld [vmem:[#allocation5 + $0x10] sm:$0xff]
      %v277 = vld [vmem:[#allocation5 + $0x18] sm:$0xff]
      %v278 = vld [vmem:[#allocation5 + $0x20] sm:$0xff]
      %v279 = vld [vmem:[#allocation5 + $0x28] sm:$0xff]
      %v280 = vld [vmem:[#allocation5 + $0x30] sm:$0xff]
      %v281 = vld [vmem:[#allocation5 + $0x38] sm:$0xff]
      %v282 = vld [vmem:[#allocation5 + $0x40] sm:$0xff]
      %v283 = vld [vmem:[#allocation5 + $0x48] sm:$0xff]
      %v284 = vld [vmem:[#allocation5 + $0x50] sm:$0xff]
      %v285 = vld [vmem:[#allocation5 + $0x58] sm:$0xff]
      %v286 = vld [vmem:[#allocation5 + $0x60] sm:$0xff]
      %v287 = vld [vmem:[#allocation5 + $0x68] sm:$0xff]
      %v288 = vld [vmem:[#allocation5 + $0x70] sm:$0xff]
      %v289 = vld [vmem:[#allocation5 + $0x78] sm:$0xff]
      %v290 = vld [vmem:[#allocation7] sm:$0xff]
      %v291 = vld [vmem:[#allocation7 + $0x8] sm:$0xff]
      %v292 = vld [vmem:[#allocation7 + $0x10] sm:$0xff]
      %v293 = vld [vmem:[#allocation7 + $0x18] sm:$0xff]
      %v294 = vld [vmem:[#allocation7 + $0x20] sm:$0xff]
      %v295 = vld [vmem:[#allocation7 + $0x28] sm:$0xff]
      %v296 = vld [vmem:[#allocation7 + $0x30] sm:$0xff]
      %v297 = vld [vmem:[#allocation7 + $0x38] sm:$0xff]
      %v298 = vld [vmem:[#allocation7 + $0x40] sm:$0xff]
      %v299 = vld [vmem:[#allocation7 + $0x48] sm:$0xff]
      %v300 = vld [vmem:[#allocation7 + $0x50] sm:$0xff]
      %v301 = vld [vmem:[#allocation7 + $0x58] sm:$0xff]
      %v302 = vld [vmem:[#allocation7 + $0x60] sm:$0xff]
      %v303 = vld [vmem:[#allocation7 + $0x68] sm:$0xff]
      %v304 = vld [vmem:[#allocation7 + $0x70] sm:$0xff]
      %v305 = vld [vmem:[#allocation7 + $0x78] sm:$0xff]
      %v306 = vsub.f32 %v258, %v274
      %v307 = vsub.f32 %v259, %v275
      %v308 = vsub.f32 %v260, %v276
      %v309 = vsub.f32 %v261, %v277
      %v310 = vsub.f32 %v262, %v278
      %v311 = vsub.f32 %v263, %v279
      %v312 = vsub.f32 %v264, %v280
      %v313 = vsub.f32 %v265, %v281
      %v314 = vsub.f32 %v266, %v282
      %v315 = vsub.f32 %v267, %v283
      %v316 = vsub.f32 %v268, %v284
      %v317 = vsub.f32 %v269, %v285
      %v318 = vsub.f32 %v270, %v286
      %v319 = vsub.f32 %v271, %v287
      %v320 = vsub.f32 %v272, %v288
      %v321 = vsub.f32 %v273, %v289
      %v322 = vand.u32 2147483647, %v306
      %v323 = vand.u32 2147483647, %v307
      %v324 = vand.u32 2147483647, %v308
      %v325 = vand.u32 2147483647, %v309
      %v326 = vand.u32 2147483647, %v310
      %v327 = vand.u32 2147483647, %v311
      %v328 = vand.u32 2147483647, %v312
      %v329 = vand.u32 2147483647, %v313
      %v330 = vand.u32 2147483647, %v314
      %v331 = vand.u32 2147483647, %v315
      %v332 = vand.u32 2147483647, %v316
      %v333 = vand.u32 2147483647, %v317
      %v334 = vand.u32 2147483647, %v318
      %v335 = vand.u32 2147483647, %v319
      %v336 = vand.u32 2147483647, %v320
      %v337 = vand.u32 2147483647, %v321
      %v338 = vmul.f32 %v290, %v322
      %v339 = vmul.f32 %v291, %v323
      %v340 = vmul.f32 %v292, %v324
      %v341 = vmul.f32 %v293, %v325
      %v342 = vmul.f32 %v294, %v326
      %v343 = vmul.f32 %v295, %v327
      %v344 = vmul.f32 %v296, %v328
      %v345 = vmul.f32 %v297, %v329
      %v346 = vmul.f32 %v298, %v330
      %v347 = vmul.f32 %v299, %v331
      %v348 = vmul.f32 %v300, %v332
      %v349 = vmul.f32 %v301, %v333
      %v350 = vmul.f32 %v302, %v334
      %v351 = vmul.f32 %v303, %v335
      %v352 = vmul.f32 %v304, %v336
      %v353 = vmul.f32 %v305, %v337
      %s354 = sadd.s32 %s114, 0
      %v355 = vlaneseq
      %v356 = vshrl.u32 %v355, 7
      %v357 = vadd.s32 %v356, 8
      %v358 = vadd.s32 %v356, 16
      %v359 = vadd.s32 %v356, 24
      %v360 = vadd.s32 %v356, 32
      %v361 = vadd.s32 %v356, 40
      %v362 = vadd.s32 %v356, 48
      %v363 = vadd.s32 %v356, 56
      %v364 = vadd.s32 %v356, 64
      %v365 = vadd.s32 %v356, 72
      %v366 = vadd.s32 %v356, 80
      %v367 = vadd.s32 %v356, 88
      %v368 = vadd.s32 %v356, 96
      %v369 = vadd.s32 %v356, 104
      %v370 = vadd.s32 %v356, 112
      %v371 = vadd.s32 %v356, 120
      %v372 = vstv %s354
      %v373 = vadd.s32 %v372, %v356
      %v374 = vadd.s32 %v372, %v357
      %v375 = vadd.s32 %v372, %v358
      %v376 = vadd.s32 %v372, %v359
      %v377 = vadd.s32 %v372, %v360
      %v378 = vadd.s32 %v372, %v361
      %v379 = vadd.s32 %v372, %v362
      %v380 = vadd.s32 %v372, %v363
      %v381 = vadd.s32 %v372, %v364
      %v382 = vadd.s32 %v372, %v365
      %v383 = vadd.s32 %v372, %v366
      %v384 = vadd.s32 %v372, %v367
      %v385 = vadd.s32 %v372, %v368
      %v386 = vadd.s32 %v372, %v369
      %v387 = vadd.s32 %v372, %v370
      %v388 = vadd.s32 %v372, %v371
      %vm389 = vcmp.lt.s32.totalorder %v373, 16
      %vm390 = vcmp.lt.s32.totalorder %v374, 16
      %vm391 = vcmp.lt.s32.totalorder %v375, 16
      %vm392 = vcmp.lt.s32.totalorder %v376, 16
      %vm393 = vcmp.lt.s32.totalorder %v377, 16
      %vm394 = vcmp.lt.s32.totalorder %v378, 16
      %vm395 = vcmp.lt.s32.totalorder %v379, 16
      %vm396 = vcmp.lt.s32.totalorder %v380, 16
      %vm397 = vcmp.lt.s32.totalorder %v381, 16
      %vm398 = vcmp.lt.s32.totalorder %v382, 16
      %vm399 = vcmp.lt.s32.totalorder %v383, 16
      %vm400 = vcmp.lt.s32.totalorder %v384, 16
      %vm401 = vcmp.lt.s32.totalorder %v385, 16
      %vm402 = vcmp.lt.s32.totalorder %v386, 16
      %vm403 = vcmp.lt.s32.totalorder %v387, 16
      %vm404 = vcmp.lt.s32.totalorder %v388, 16
      %v405 = vsel %vm389, %v338, 0.0
      %v406 = vsel %vm390, %v339, 0.0
      %v407 = vsel %vm391, %v340, 0.0
      %v408 = vsel %vm392, %v341, 0.0
      %v409 = vsel %vm393, %v342, 0.0
      %v410 = vsel %vm394, %v343, 0.0
      %v411 = vsel %vm395, %v344, 0.0
      %v412 = vsel %vm396, %v345, 0.0
      %v413 = vsel %vm397, %v346, 0.0
      %v414 = vsel %vm398, %v347, 0.0
      %v415 = vsel %vm399, %v348, 0.0
      %v416 = vsel %vm400, %v349, 0.0
      %v417 = vsel %vm401, %v350, 0.0
      %v418 = vsel %vm402, %v351, 0.0
      %v419 = vsel %vm403, %v352, 0.0
      %v420 = vsel %vm404, %v353, 0.0
      %v421 = vsel %vm389, %v290, 0.0
      %v422 = vsel %vm390, %v291, 0.0
      %v423 = vsel %vm391, %v292, 0.0
      %v424 = vsel %vm392, %v293, 0.0
      %v425 = vsel %vm393, %v294, 0.0
      %v426 = vsel %vm394, %v295, 0.0
      %v427 = vsel %vm395, %v296, 0.0
      %v428 = vsel %vm396, %v297, 0.0
      %v429 = vsel %vm397, %v298, 0.0
      %v430 = vsel %vm398, %v299, 0.0
      %v431 = vsel %vm399, %v300, 0.0
      %v432 = vsel %vm400, %v301, 0.0
      %v433 = vsel %vm401, %v302, 0.0
      %v434 = vsel %vm402, %v303, 0.0
      %v435 = vsel %vm403, %v304, 0.0
      %v436 = vsel %vm404, %v305, 0.0
      %v437 = vadd.f32 %v405, %v406
      %v438 = vadd.f32 %v437, %v407
      %v439 = vadd.f32 %v438, %v408
      %v440 = vadd.f32 %v439, %v409
      %v441 = vadd.f32 %v440, %v410
      %v442 = vadd.f32 %v441, %v411
      %v443 = vadd.f32 %v442, %v412
      %v444 = vadd.f32 %v443, %v413
      %v445 = vadd.f32 %v444, %v414
      %v446 = vadd.f32 %v445, %v415
      %v447 = vadd.f32 %v446, %v416
      %v448 = vadd.f32 %v447, %v417
      %v449 = vadd.f32 %v448, %v418
      %v450 = vadd.f32 %v449, %v419
      %v451 = vadd.f32 %v450, %v420
      %v452 = vadd.f32 %v451, 0.0
      %v453 = vadd.f32 %v421, %v422
      %v454 = vadd.f32 %v453, %v423
      %v455 = vadd.f32 %v454, %v424
      %v456 = vadd.f32 %v455, %v425
      %v457 = vadd.f32 %v456, %v426
      %v458 = vadd.f32 %v457, %v427
      %v459 = vadd.f32 %v458, %v428
      %v460 = vadd.f32 %v459, %v429
      %v461 = vadd.f32 %v460, %v430
      %v462 = vadd.f32 %v461, %v431
      %v463 = vadd.f32 %v462, %v432
      %v464 = vadd.f32 %v463, %v433
      %v465 = vadd.f32 %v464, %v434
      %v466 = vadd.f32 %v465, %v435
      %v467 = vadd.f32 %v466, %v436
      %v468 = vadd.f32 %v467, 0.0
      %v469 = vld [vmem:[#allocation8] sm:$0xff]
      %v470 = vadd.f32 %v469, %v452
      %471 = vst [vmem:[#allocation8] sm:$0xff] %v470
      %v472 = vld [vmem:[#allocation9] sm:$0xff]
      %v473 = vadd.f32 %v472, %v468
      %474 = vst [vmem:[#allocation9] sm:$0xff] %v473
    $region37: #{tpu_custom_call.1} parent=1 // pred_fallthru
      _
    // Predicated region
    $region38: #{tpu_custom_call.1} parent=1 // pred_check
      _
    $region39: #{tpu_custom_call.1} parent=1 // pred_check_branch
      %476 = sbr.rel (0) target = $region41
    $region40: #{tpu_custom_call.1} parent=1 // pred_region
      %s478 = ssub.s32 128, 128
      %479 = vsyncadd [#allocation4], %s478
      %s481 = sshll.u32 [#allocation8], 4
      %s482 = int_to_ptr.vmem [resolvable:$true] %s481
      %484 = dma.vmem_to_hbm [thread:$0]  %s482, 128, %s3, [#allocation4]
    $region41: #{tpu_custom_call.1} parent=1 // pred_fallthru
      _
    // Predicated region
    $region42: #{tpu_custom_call.1} parent=1 // pred_check
      _
    $region43: #{tpu_custom_call.1} parent=1 // pred_check_branch
      %486 = sbr.rel (0) target = $region45
    $region44: #{tpu_custom_call.1} parent=1 // pred_region
      %s488 = ssub.s32 128, 128
      %489 = vsyncadd [#allocation10], %s488
      %s491 = sshll.u32 [#allocation9], 4
      %s492 = int_to_ptr.vmem [resolvable:$true] %s491
      %494 = dma.vmem_to_hbm [thread:$0]  %s492, 128, %s4, [#allocation10]
    $region45: #{tpu_custom_call.1} parent=1 // pred_fallthru
      _
    // Predicated region
    $region46: #{tpu_custom_call.1} parent=1 // pred_check
      _
    $region47: #{tpu_custom_call.1} parent=1 // pred_check_branch
      %496 = sbr.rel (0) target = $region49
    $region48: #{tpu_custom_call.1} parent=1 // pred_region
      %497 = dma.done [#allocation4], 128
    $region49: #{tpu_custom_call.1} parent=1 // pred_fallthru
      _
    // Predicated region
    $region50: #{tpu_custom_call.1} parent=1 // pred_check
      _
    $region51: #{tpu_custom_call.1} parent=1 // pred_check_branch
      %499 = sbr.rel (0) target = $region53
    $region52: #{tpu_custom_call.1} parent=1 // pred_region
      %500 = dma.done [#allocation10], 128
    $region53: #{tpu_custom_call.1} parent=1 // pred_fallthru
      _
    %501 = vsyncpa [#allocation3], 1
    %502 = vsyncpa [#allocation6], 1
    %503 = vsyncpa [#allocation4], 1
    %504 = vsyncpa [#allocation10], 1

</llo_original>
